<compile_context>
chip_gen: v5e
topology: v5e:2x2
jax: 0.10.0
libtpu: 0.0.40
codegen_flags: <defaults>
</compile_context>

<pallas_src>
import functools

import jax
import jax.numpy as jnp
from jax.experimental import pallas as pl
from jax.experimental.pallas import tpu as pltpu

_SUBLANE = 8
_MAX_VOCAB_CHUNK = 2048       # vocab chunk (lane-dense) for very large vocabs
_MIN_PALLAS_VOCAB = 128       # below this, plain XLA beats a Pallas launch
_NEG_BIG = -1e30              # finite "-inf": masked entries never produce NaN


def _select_budgets():
    """Per-generation VMEM budgets: (tile_budget, scoped_vmem_limit, max_row_tile)."""
    vmem_cap = None
    try:
        vmem_cap = int(getattr(pltpu.get_tpu_info(), "vmem_capacity_bytes", 0)) or None
    except Exception:
        vmem_cap = None
    if vmem_cap is not None and vmem_cap >= (96 << 20):
        # v5e / v6e: 128 MiB physical VMEM — use big double-buffered tiles.
        return 64 << 20, 96 << 20, 2048
    # v7x (64 MiB per TC) or unknown: conservative settings.
    return 24 << 20, 48 << 20, 1024


_TILE_BUDGET_BYTES, _VMEM_LIMIT_BYTES, _MAX_ROW_TILE = _select_budgets()


def _masked_nll_kernel(logits_ref, labels_ref, nll_ref,
                       m_sc, l_sc, c_sc,
                       *, n_rows, tile_rows, vocab, chunk):
    """Per-row masked NLL with an online log-sum-exp over vocab chunks."""
    i = pl.program_id(0)            # row-tile axis ("parallel")
    j = pl.program_id(1)            # vocab-chunk axis ("arbitrary", reduction)
    nj = pl.num_programs(1)

    # Static (trace-time) decisions — no per-element mask work unless needed.
    need_row_mask = (n_rows % tile_rows) != 0
    need_lane_mask = (vocab % chunk) != 0

    @pl.when(j == 0)
    def _():
        m_sc[...] = jnp.full_like(m_sc, _NEG_BIG)
        l_sc[...] = jnp.zeros_like(l_sc)
        c_sc[...] = jnp.zeros_like(c_sc)

    x = logits_ref[...].astype(jnp.float32)                 # (TR, VC)
    lab = labels_ref[...]                                   # (TR, 1) int32; <0 => ignore

    # Lane iota as a single (1, chunk) row; comparisons broadcast it.
    lane = j * chunk + jax.lax.broadcasted_iota(jnp.int32, (1, chunk), 1)

    if need_row_mask or need_lane_mask:
        ok = None
        if need_row_mask:
            # Keeps undefined tail-row VMEM data strictly out of the exp path.
            row_id = i * tile_rows + jax.lax.broadcasted_iota(
                jnp.int32, (tile_rows, 1), 0)               # (TR, 1)
            ok = row_id < n_rows
        if need_lane_mask:
            lane_ok = lane < vocab                          # (1, VC); all-true except tail
            ok = lane_ok if ok is None else jnp.logical_and(ok, lane_ok)
        x = jnp.where(ok, x, _NEG_BIG)

    # Online LSE update (flash-style) + correct-logit accumulation.
    m_new = jnp.maximum(m_sc[...], jnp.max(x, axis=-1, keepdims=True))
    alpha = jnp.exp(m_sc[...] - m_new)
    l_sc[...] = alpha * l_sc[...] + jnp.sum(jnp.exp(x - m_new),
                                            axis=-1, keepdims=True)
    m_sc[...] = m_new
    c_sc[...] = c_sc[...] + jnp.sum(jnp.where(lane == lab, x, 0.0),
                                    axis=-1, keepdims=True)

    @pl.when(j == nj - 1)
    def _():
        lse = m_sc[...] + jnp.log(l_sc[...])
        valid = lab >= 0
        if need_row_mask:
            row_id = i * tile_rows + jax.lax.broadcasted_iota(
                jnp.int32, (tile_rows, 1), 0)
            valid = jnp.logical_and(valid, row_id < n_rows)
        w = jnp.where(valid, 1.0, 0.0)
        nll_ref[...] = ((lse - c_sc[...]) * w).astype(nll_ref.dtype)


def _choose_tiles(n, v, itemsize):
    """Pick (row_tile, vocab_chunk) so the double-buffered logits tile fits VMEM."""
    chunk = v if v <= _MAX_VOCAB_CHUNK else _MAX_VOCAB_CHUNK
    tr = (_TILE_BUDGET_BYTES // (2 * chunk * itemsize) // _SUBLANE) * _SUBLANE
    tr = max(_SUBLANE, min(_MAX_ROW_TILE, tr))
    if n >= _SUBLANE:
        tr = min(tr, (n // _SUBLANE) * _SUBLANE)   # keep block <= array on rows
    # v7x megacore: make sure the "parallel" row axis has >= 2 tiles when N allows,
    # so both TensorCores get work.
    if -(-n // tr) < 2 and n > _SUBLANE:
        half = -(-n // 2)
        tr = max(_SUBLANE, -(-half // _SUBLANE) * _SUBLANE)
    # Prefer a row tile that divides N exactly (drops the row-tail mask at trace
    # time); only accept if it does not shrink the tile below half the target.
    if n % tr != 0:
        for cand in range(tr, _SUBLANE - 1, -_SUBLANE):
            if n % cand == 0:
                if cand * 2 >= tr:
                    tr = cand
                break
    return tr, chunk


def _masked_ce_mean_xla(logits, labels):
    """Plain-XLA masked mean CE for lane-sparse (small-V) inputs."""
    valid = labels >= 0
    safe = jnp.where(valid, labels, 0).astype(jnp.int32)
    logp = jax.nn.log_softmax(logits.astype(jnp.float32), axis=-1)
    nll = -jnp.take_along_axis(logp, safe[:, None], axis=-1)[:, 0]
    w = valid.astype(jnp.float32)
    return jnp.sum(nll * w) / jnp.sum(w)


def _masked_ce_mean(logits, labels):
    """Mean cross-entropy over rows with label >= 0 (label < 0 => ignored row)."""
    n, v = logits.shape
    if v < _MIN_PALLAS_VOCAB:
        # Tiny vocab (e.g. the type vocabulary): a (rows, V<128) Pallas block
        # wastes >80% of every vreg lane — let XLA fuse it instead.
        return _masked_ce_mean_xla(logits, labels)

    labels2d = labels.reshape(n, 1).astype(jnp.int32)
    itemsize = jnp.dtype(logits.dtype).itemsize
    tr, chunk = _choose_tiles(n, v, itemsize)
    n_row_tiles = -(-n // tr)
    n_vchunks = -(-v // chunk)

    kernel = functools.partial(_masked_nll_kernel, n_rows=n, tile_rows=tr,
                               vocab=v, chunk=chunk)
    cost = pl.CostEstimate(
        flops=int(6 * n * v),
        transcendentals=int(n * v),
        bytes_accessed=int(n * v * itemsize + n * 4 + n * 4),
    )
    nll = pl.pallas_call(
        kernel,
        out_shape=jax.ShapeDtypeStruct((n, 1), jnp.float32),
        grid_spec=pltpu.PrefetchScalarGridSpec(
            num_scalar_prefetch=0,
            grid=(n_row_tiles, n_vchunks),
            in_specs=[
                pl.BlockSpec((tr, chunk), lambda i, j: (i, j)),   # logits
                pl.BlockSpec((tr, 1), lambda i, j: (i, 0)),       # fused labels/valid
            ],
            out_specs=pl.BlockSpec((tr, 1), lambda i, j: (i, 0)),  # per-row NLL
            scratch_shapes=[pltpu.VMEM((tr, 1), jnp.float32)] * 3,  # m, l, correct
        ),
        compiler_params=pltpu.CompilerParams(
            dimension_semantics=("parallel", "arbitrary"),
            vmem_limit_bytes=_VMEM_LIMIT_BYTES,
        ),
        cost_estimate=cost,
    )(logits, labels2d)

    count = jnp.sum((labels >= 0).astype(jnp.float32))
    # NOTE: if no row is valid, count == 0 and this yields inf/NaN, matching
    # the PyTorch / pure-JAX reference behaviour for that degenerate input.
    return jnp.sum(nll) / count


class MixedLossPallas:
    """JAX/Pallas port of TypeLM MixedLoss with CrossEntropy lang/type losses."""

    def __init__(self, type_ignore_index: int = 0, type_loss_scale: float = 1.0):
        self.type_ignore_index = type_ignore_index
        self.type_loss_scale = type_loss_scale

    @functools.partial(jax.jit, static_argnums=0)
    def __call__(self, word_predictions, word_truth, type_predictions,
                 type_truth, mask):
        b, s, vw = word_predictions.shape
        vt = type_predictions.shape[-1]
        n = b * s

        # lang loss: rows where mask == 1 (fuse mask into labels as -1 = ignore)
        w_logits = word_predictions.reshape(n, vw)
        w_labels = jnp.where(mask.reshape(n) == 1,
                             word_truth.reshape(n).astype(jnp.int32),
                             jnp.int32(-1))

        # type loss: rows whose label != ignore_index
        t_logits = type_predictions.reshape(n, vt)
        tt = type_truth.reshape(n).astype(jnp.int32)
        t_labels = jnp.where(tt != self.type_ignore_index, tt, jnp.int32(-1))

        lang_loss = _masked_ce_mean(w_logits, w_labels)
        type_loss = _masked_ce_mean(t_logits, t_labels)
        return lang_loss, type_loss * self.type_loss_scale


def _reference(word_predictions, word_truth, type_predictions, type_truth,
               mask, type_ignore_index=0, type_loss_scale=1.0):
    """Pure-JAX reference mirroring PyTorch semantics."""
    def masked_ce(logits, labels, valid):
        logp = jax.nn.log_softmax(logits.astype(jnp.float32), axis=-1)
        nll = -jnp.take_along_axis(logp, labels[:, None].astype(jnp.int32),
                                   axis=-1)[:, 0]
        return jnp.sum(nll * valid) / jnp.sum(valid)

    b, s, vw = word_predictions.shape
    vt = type_predictions.shape[-1]
    lang = masked_ce(word_predictions.reshape(b * s, vw),
                     word_truth.reshape(b * s),
                     (mask.reshape(b * s) == 1).astype(jnp.float32))
    typ = masked_ce(type_predictions.reshape(b * s, vt),
                    type_truth.reshape(b * s),
                    (type_truth.reshape(b * s) != type_ignore_index
                     ).astype(jnp.float32))
    return lang, typ * type_loss_scale


if __name__ == "__main__":
    key = jax.random.PRNGKey(0)
    # n = B*S = 18 exercises the in-kernel row-tail masking (row tile = 16);
    # VW=160 exercises the Pallas path with a full-width, unpadded vocab block;
    # VT=24 exercises the lane-sparse XLA fallback.
    B, S, VW, VT = 2, 9, 160, 24

    k1, k2, k3, k4, k5 = jax.random.split(key, 5)
    word_predictions = jax.random.normal(k1, (B, S, VW), dtype=jnp.float32)
    word_truth = jax.random.randint(k2, (B, S), 0, VW, dtype=jnp.int32)
    type_predictions = jax.random.normal(k3, (B, S, VT), dtype=jnp.float32)
    type_truth = jax.random.randint(k4, (B, S), 0, VT, dtype=jnp.int32)
    mask = (jax.random.uniform(k5, (B, S)) > 0.3).astype(jnp.int32)
    # make sure at least one masked token / one non-ignored type exists
    mask = mask.at[0, 0].set(1)
    type_truth = type_truth.at[0, 0].set(1)

    loss_mod = MixedLossPallas(type_ignore_index=0, type_loss_scale=1.0)
    lang_loss, type_loss = loss_mod(word_predictions, word_truth,
                                    type_predictions, type_truth, mask)
    jax.block_until_ready((lang_loss, type_loss))

    ref_lang, ref_type = _reference(word_predictions, word_truth,
                                    type_predictions, type_truth, mask)
    assert jnp.allclose(lang_loss, ref_lang, rtol=1e-5, atol=1e-5), (lang_loss, ref_lang)
    assert jnp.allclose(type_loss, ref_type, rtol=1e-5, atol=1e-5), (type_loss, ref_type)

    print("KERNEL_OK")
</pallas_src>

<mosaic_0001>
module attributes {stable_mosaic.version = 11 : i64} {
  func.func @_masked_nll_kernel(%arg0: i32, %arg1: i32, %arg2: memref<16x160xf32, #tpu.memory_space<vmem>>, %arg3: memref<16x1xi32, #tpu.memory_space<vmem>>, %arg4: memref<16x1xf32, #tpu.memory_space<vmem>>, %arg5: memref<16x1xf32, #tpu.memory_space<vmem>>, %arg6: memref<16x1xf32, #tpu.memory_space<vmem>>, %arg7: memref<16x1xf32, #tpu.memory_space<vmem>>) attributes {dimension_semantics = [#tpu.dimension_semantics<parallel>, #tpu.dimension_semantics<arbitrary>], iteration_bounds = array<i64: 2, 1>, scalar_prefetch = 0 : i64, scratch_operands = 3 : i64, tpu.core_type = #tpu.core_type<tc>, window_params = [{transform_indices = @transform_0, window_bounds = array<i64: 16, 160>}, {transform_indices = @transform_1, window_bounds = array<i64: 16, 1>}, {transform_indices = @transform_2, window_bounds = array<i64: 16, 1>}]} {
    %c0_i32 = arith.constant 0 : i32
    %0 = arith.cmpi eq, %arg1, %c0_i32 : i32
    %1 = arith.extui %0 : i1 to i32
    %c0_i32_0 = arith.constant 0 : i32
    %2 = arith.cmpi ne, %1, %c0_i32_0 : i32
    scf.if %2 {
      %cst_24 = arith.constant -1.000000e+30 : f32
      %49 = vector.broadcast %cst_24 : f32 to vector<16x1xf32>
      %c0_25 = arith.constant 0 : index
      %c0_26 = arith.constant 0 : index
      %50 = vector.load %arg5[%c0_25, %c0_26] : memref<16x1xf32, #tpu.memory_space<vmem>>, vector<16x1xf32>
      tpu.vector_store %arg5[%c0_25, %c0_26], %49 {strides = array<i32>} : memref<16x1xf32, #tpu.memory_space<vmem>>, vector<16x1xf32>,
      %cst_27 = arith.constant 0.000000e+00 : f32
      %51 = vector.broadcast %cst_27 : f32 to vector<16x1xf32>
      %c0_28 = arith.constant 0 : index
      %c0_29 = arith.constant 0 : index
      %52 = vector.load %arg6[%c0_28, %c0_29] : memref<16x1xf32, #tpu.memory_space<vmem>>, vector<16x1xf32>
      tpu.vector_store %arg6[%c0_28, %c0_29], %51 {strides = array<i32>} : memref<16x1xf32, #tpu.memory_space<vmem>>, vector<16x1xf32>,
      %cst_30 = arith.constant 0.000000e+00 : f32
      %53 = vector.broadcast %cst_30 : f32 to vector<16x1xf32>
      %c0_31 = arith.constant 0 : index
      %c0_32 = arith.constant 0 : index
      %54 = vector.load %arg7[%c0_31, %c0_32] : memref<16x1xf32, #tpu.memory_space<vmem>>, vector<16x1xf32>
      tpu.vector_store %arg7[%c0_31, %c0_32], %53 {strides = array<i32>} : memref<16x1xf32, #tpu.memory_space<vmem>>, vector<16x1xf32>,
    } else {
    }
    %c0 = arith.constant 0 : index
    %c0_1 = arith.constant 0 : index
    %3 = vector.load %arg2[%c0, %c0_1] : memref<16x160xf32, #tpu.memory_space<vmem>>, vector<16x160xf32>
    %c0_2 = arith.constant 0 : index
    %c0_3 = arith.constant 0 : index
    %4 = vector.load %arg3[%c0_2, %c0_3] : memref<16x1xi32, #tpu.memory_space<vmem>>, vector<16x1xi32>
    %c160_i32 = arith.constant 160 : i32
    %5 = arith.muli %arg1, %c160_i32 : i32
    %6 = tpu.iota {dimensions = array<i32: 1>} : vector<1x160xi32>
    %7 = vector.broadcast %5 : i32 to vector<1x160xi32>
    %8 = arith.addi %7, %6 : vector<1x160xi32>
    %c16_i32 = arith.constant 16 : i32
    %9 = arith.muli %arg0, %c16_i32 : i32
    %10 = tpu.iota {dimensions = array<i32: 0>} : vector<16x1xi32>
    %11 = vector.broadcast %9 : i32 to vector<16x1xi32>
    %12 = arith.addi %11, %10 : vector<16x1xi32>
    %c18_i32 = arith.constant 18 : i32
    %13 = vector.broadcast %c18_i32 : i32 to vector<16x1xi32>
    %14 = arith.cmpi slt, %12, %13 : vector<16x1xi32>
    %cst = arith.constant -1.000000e+30 : f32
    %15 = vector.shape_cast %14 : vector<16x1xi1> to vector<16x1xi1>
    %16 = vector.broadcast %15 : vector<16x1xi1> to vector<16x160xi1>
    %17 = vector.broadcast %cst : f32 to vector<16x160xf32>
    %18 = arith.select %16, %3, %17 : vector<16x160xi1>, vector<16x160xf32>
    %c0_4 = arith.constant 0 : index
    %c0_5 = arith.constant 0 : index
    %19 = vector.load %arg5[%c0_4, %c0_5] : memref<16x1xf32, #tpu.memory_space<vmem>>, vector<16x1xf32>
    %cst_6 = arith.constant dense<0xFF800000> : vector<16xf32>
    %20 = vector.multi_reduction <maximumf>, %18, %cst_6 [1] : vector<16x160xf32> to vector<16xf32>
    %21 = vector.shape_cast %20 : vector<16xf32> to vector<16x1xf32>
    %22 = arith.maximumf %19, %21 : vector<16x1xf32>
    %c0_7 = arith.constant 0 : index
    %c0_8 = arith.constant 0 : index
    %23 = vector.load %arg5[%c0_7, %c0_8] : memref<16x1xf32, #tpu.memory_space<vmem>>, vector<16x1xf32>
    %24 = arith.subf %23, %22 : vector<16x1xf32>
    %25 = math.exp %24 : vector<16x1xf32>
    %c0_9 = arith.constant 0 : index
    %c0_10 = arith.constant 0 : index
    %26 = vector.load %arg6[%c0_9, %c0_10] : memref<16x1xf32, #tpu.memory_space<vmem>>, vector<16x1xf32>
    %27 = arith.mulf %25, %26 : vector<16x1xf32>
    %28 = vector.broadcast %22 : vector<16x1xf32> to vector<16x160xf32>
    %29 = arith.subf %18, %28 : vector<16x160xf32>
    %30 = math.exp %29 : vector<16x160xf32>
    %cst_11 = arith.constant dense<0.000000e+00> : vector<16xf32>
    %31 = vector.multi_reduction <add>, %30, %cst_11 [1] : vector<16x160xf32> to vector<16xf32>
    %32 = vector.shape_cast %31 : vector<16xf32> to vector<16x1xf32>
    %33 = arith.addf %27, %32 : vector<16x1xf32>
    %c0_12 = arith.constant 0 : index
    %c0_13 = arith.constant 0 : index
    %34 = vector.load %arg6[%c0_12, %c0_13] : memref<16x1xf32, #tpu.memory_space<vmem>>, vector<16x1xf32>
    tpu.vector_store %arg6[%c0_12, %c0_13], %33 {strides = array<i32>} : memref<16x1xf32, #tpu.memory_space<vmem>>, vector<16x1xf32>,
    %c0_14 = arith.constant 0 : index
    %c0_15 = arith.constant 0 : index
    %35 = vector.load %arg5[%c0_14, %c0_15] : memref<16x1xf32, #tpu.memory_space<vmem>>, vector<16x1xf32>
    tpu.vector_store %arg5[%c0_14, %c0_15], %22 {strides = array<i32>} : memref<16x1xf32, #tpu.memory_space<vmem>>, vector<16x1xf32>,
    %c0_16 = arith.constant 0 : index
    %c0_17 = arith.constant 0 : index
    %36 = vector.load %arg7[%c0_16, %c0_17] : memref<16x1xf32, #tpu.memory_space<vmem>>, vector<16x1xf32>
    %37 = vector.broadcast %8 : vector<1x160xi32> to vector<16x160xi32>
    %38 = vector.broadcast %4 : vector<16x1xi32> to vector<16x160xi32>
    %39 = arith.cmpi eq, %37, %38 : vector<16x160xi32>
    %cst_18 = arith.constant 0.000000e+00 : f32
    %40 = vector.broadcast %cst_18 : f32 to vector<16x160xf32>
    %41 = arith.select %39, %18, %40 : vector<16x160xi1>, vector<16x160xf32>
    %cst_19 = arith.constant dense<0.000000e+00> : vector<16xf32>
    %42 = vector.multi_reduction <add>, %41, %cst_19 [1] : vector<16x160xf32> to vector<16xf32>
    %43 = vector.shape_cast %42 : vector<16xf32> to vector<16x1xf32>
    %44 = arith.addf %36, %43 : vector<16x1xf32>
    %c0_20 = arith.constant 0 : index
    %c0_21 = arith.constant 0 : index
    %45 = vector.load %arg7[%c0_20, %c0_21] : memref<16x1xf32, #tpu.memory_space<vmem>>, vector<16x1xf32>
    tpu.vector_store %arg7[%c0_20, %c0_21], %44 {strides = array<i32>} : memref<16x1xf32, #tpu.memory_space<vmem>>, vector<16x1xf32>,
    %c0_i32_22 = arith.constant 0 : i32
    %46 = arith.cmpi eq, %arg1, %c0_i32_22 : i32
    %47 = arith.extui %46 : i1 to i32
    %c0_i32_23 = arith.constant 0 : i32
    %48 = arith.cmpi ne, %47, %c0_i32_23 : i32
    scf.if %48 {
      %c0_24 = arith.constant 0 : index
      %c0_25 = arith.constant 0 : index
      %49 = vector.load %arg5[%c0_24, %c0_25] : memref<16x1xf32, #tpu.memory_space<vmem>>, vector<16x1xf32>
      %c0_26 = arith.constant 0 : index
      %c0_27 = arith.constant 0 : index
      %50 = vector.load %arg6[%c0_26, %c0_27] : memref<16x1xf32, #tpu.memory_space<vmem>>, vector<16x1xf32>
      %51 = math.log %50 : vector<16x1xf32>
      %52 = arith.addf %49, %51 : vector<16x1xf32>
      %c0_i32_28 = arith.constant 0 : i32
      %53 = vector.broadcast %c0_i32_28 : i32 to vector<16x1xi32>
      %54 = arith.cmpi sge, %4, %53 : vector<16x1xi32>
      %c16_i32_29 = arith.constant 16 : i32
      %55 = arith.muli %arg0, %c16_i32_29 : i32
      %56 = tpu.iota {dimensions = array<i32: 0>} : vector<16x1xi32>
      %57 = vector.broadcast %55 : i32 to vector<16x1xi32>
      %58 = arith.addi %57, %56 : vector<16x1xi32>
      %c18_i32_30 = arith.constant 18 : i32
      %59 = vector.broadcast %c18_i32_30 : i32 to vector<16x1xi32>
      %60 = arith.cmpi slt, %58, %59 : vector<16x1xi32>
      %61 = arith.andi %54, %60 : vector<16x1xi1>
      %cst_31 = arith.constant 1.000000e+00 : f32
      %cst_32 = arith.constant 0.000000e+00 : f32
      %62 = vector.broadcast %cst_31 : f32 to vector<16x1xf32>
      %63 = vector.broadcast %cst_32 : f32 to vector<16x1xf32>
      %64 = arith.select %61, %62, %63 : vector<16x1xi1>, vector<16x1xf32>
      %c0_33 = arith.constant 0 : index
      %c0_34 = arith.constant 0 : index
      %65 = vector.load %arg7[%c0_33, %c0_34] : memref<16x1xf32, #tpu.memory_space<vmem>>, vector<16x1xf32>
      %66 = arith.subf %52, %65 : vector<16x1xf32>
      %67 = arith.mulf %66, %64 : vector<16x1xf32>
      %c0_35 = arith.constant 0 : index
      %c0_36 = arith.constant 0 : index
      %68 = vector.load %arg4[%c0_35, %c0_36] : memref<16x1xf32, #tpu.memory_space<vmem>>, vector<16x1xf32>
      tpu.vector_store %arg4[%c0_35, %c0_36], %67 {strides = array<i32>} : memref<16x1xf32, #tpu.memory_space<vmem>>, vector<16x1xf32>,
    } else {
    }
    return
  }
  func.func @transform_0(%arg0: i32, %arg1: i32) -> (i32, i32) {
    %c0_i32 = arith.constant 0 : i32
    return %arg0, %arg1 : i32, i32
  }
  func.func @transform_1(%arg0: i32, %arg1: i32) -> (i32, i32) {
    %c0_i32 = arith.constant 0 : i32
    %c0_i32_0 = arith.constant 0 : i32
    return %arg0, %c0_i32 : i32, i32
  }
  func.func @transform_2(%arg0: i32, %arg1: i32) -> (i32, i32) {
    %c0_i32 = arith.constant 0 : i32
    %c0_i32_0 = arith.constant 0 : i32
    return %arg0, %c0_i32 : i32, i32
  }
}

</mosaic_0001>

<llo_original>
// kernel: a_call__.1
$region0: #{a_call__.1}
  #allocation0 [shape = 'u32[]', space=smem, size = 0x4, offset = 0x4, fixed_abs, tag = 'smem constant byte address 0x4 - core index']
  #allocation1 [shape = 'u32[72,128]{1,0:T(1,128)}', space=vmem, size = 0x9000, scoped, tag = 'internal scratch']
  #allocation2 [shape = 'f32[16,1]{1,0:T(8,128)}', space=vmem, size = 0x2000, scoped, tag = 'scratch operand']
  #allocation3 [shape = 'f32[16,1]{1,0:T(8,128)}', space=vmem, size = 0x2000, scoped, tag = 'scratch operand']
  #allocation4 [shape = 'f32[16,1]{1,0:T(8,128)}', space=vmem, size = 0x2000, scoped, tag = 'scratch operand']
  %s0 = inlined_call_operand.vmem [shape: f32[18,160], index: 0, kind: input, shape index: {}]
  %s1 = inlined_call_operand.vmem [shape: s32[18,1], index: 1, kind: input, shape index: {}]
  %s2 = inlined_call_operand.vmem [shape: f32[18,1], index: 2, kind: output, shape index: {}]
  %s3 = sld [smem:[#allocation0]]
  $region97: #{a_call__.1} parent=0
    _
  %s5 = ssub.s32 1, %s3
  %s6 = scalar_select 0, %s5, %s3
  $region1: #{a_call__.1} parent=0
    #allocation5 [shape = 'u8[16384]{0}', space=vmem, size = 0x4000, scoped, tag = 'output window, operand 0']
    loop: start=0, step=1, limit=4
    $region2: #{a_call__.1} parent=1 // loop_pre_header
      _
    $region3: #{a_call__.1} parent=1 // loop_header
      %s8 = sphi 0, %s12
      %p9 = scmp.ge.s32.totalorder %s8, 4
      %s15 = sphi 0, %s27
      %s16 = sphi 0, %s23
      %s17 = sphi 0, %s15
      %s18 = sphi 0, %s16
      %s19 = sphi 0, %s17
      %s20 = sphi 0, %s18
      %s32 = sphi 0, %s34
      %s35 = sphi 0, %s32
      %s36 = sphi 0, %s35
      %s52 = sphi 0, %s36
      %s58 = sphi 0, %s60
      %s61 = sphi 0, %s58
      %s62 = sphi 0, %s61
      %s78 = sphi 0, %s62
      %s84 = sphi 0, %s86
      %s87 = sphi 0, %s84
      %s88 = sphi 0, %s87
      %s104 = sphi 0, %s88
    $region4: #{a_call__.1} parent=1 // loop_header_branch
      %11 = sbr.rel (%p9) target = $region8
    $region5: #{a_call__.1} parent=1 // loop_body
      %s13 = ssub.s32 %s8, 1
      %s14 = ssub.s32 %s8, 2
      %s21 = sadd.s32 1, %s16
      %p22 = scmp.ge.s32.totalorder %s21, 1
      %s23 = scalar_select %p22, 0, %s21
      %s24 = sadd.s32 1, %s15
      %s25 = scalar_select %p22, %s24, %s15
      %p26 = scmp.ge.s32.totalorder %s25, 2
      %s27 = scalar_select %p26, 0, %s25
      %s28 = ssub.s32 %s15, %s27
      %s29 = ssub.s32 %s16, %s23
      %s30 = sor.u32 %s28, %s29
      %p31 = scmp.eq.s32.totalorder %s30, 0
      %s33 = sadd.s32 %s32, 1
      %s34 = scalar_select %p31, %s32, %s33
      %p37 = pneg %p31
      %p38 = scmp.eq.s32.totalorder %s8, 1
      %p39 = por %p37, %p38
      %p40 = scmp.ne.s32.totalorder %s32, %s35
      %p41 = scmp.eq.s32.totalorder %s8, 0
      %p42 = por %p40, %p41
      %p43 = scmp.ne.s32.totalorder %s32, %s35
      %p44 = scmp.eq.s32.totalorder %s13, 1
      %p45 = por %p43, %p44
      %p46 = scmp.ne.s32.totalorder %s35, %s36
      %p47 = scmp.eq.s32.totalorder %s13, 0
      %p48 = por %p46, %p47
      %p49 = scmp.ne.s32.totalorder %s35, %s36
      %p50 = scmp.eq.s32.totalorder %s14, 1
      %p51 = por %p49, %p50
      %p53 = scmp.ne.s32.totalorder %s36, %s52
      %p54 = scmp.eq.s32.totalorder %s14, 0
      %p55 = por %p53, %p54
      %s56 = ssub.s32 %s15, %s27
      %p57 = scmp.eq.s32.totalorder %s56, 0
      %s59 = sadd.s32 %s58, 1
      %s60 = scalar_select %p57, %s58, %s59
      %p63 = pneg %p57
      %p64 = scmp.eq.s32.totalorder %s8, 1
      %p65 = por %p63, %p64
      %p66 = scmp.ne.s32.totalorder %s58, %s61
      %p67 = scmp.eq.s32.totalorder %s8, 0
      %p68 = por %p66, %p67
      %p69 = scmp.ne.s32.totalorder %s58, %s61
      %p70 = scmp.eq.s32.totalorder %s13, 1
      %p71 = por %p69, %p70
      %p72 = scmp.ne.s32.totalorder %s61, %s62
      %p73 = scmp.eq.s32.totalorder %s13, 0
      %p74 = por %p72, %p73
      %p75 = scmp.ne.s32.totalorder %s61, %s62
      %p76 = scmp.eq.s32.totalorder %s14, 1
      %p77 = por %p75, %p76
      %p79 = scmp.ne.s32.totalorder %s62, %s78
      %p80 = scmp.eq.s32.totalorder %s14, 0
      %p81 = por %p79, %p80
      %s82 = ssub.s32 %s15, %s27
      %p83 = scmp.eq.s32.totalorder %s82, 0
      %s85 = sadd.s32 %s84, 1
      %s86 = scalar_select %p83, %s84, %s85
      %p89 = pneg %p83
      %p90 = scmp.eq.s32.totalorder %s8, 1
      %p91 = por %p89, %p90
      %p92 = scmp.ne.s32.totalorder %s84, %s87
      %p93 = scmp.eq.s32.totalorder %s8, 0
      %p94 = por %p92, %p93
      %p95 = scmp.ne.s32.totalorder %s84, %s87
      %p96 = scmp.eq.s32.totalorder %s13, 1
      %p97 = por %p95, %p96
      %p98 = scmp.ne.s32.totalorder %s87, %s88
      %p99 = scmp.eq.s32.totalorder %s13, 0
      %p100 = por %p98, %p99
      %p101 = scmp.ne.s32.totalorder %s87, %s88
      %p102 = scmp.eq.s32.totalorder %s14, 1
      %p103 = por %p101, %p102
      %p105 = scmp.ne.s32.totalorder %s88, %s104
      %p106 = scmp.eq.s32.totalorder %s14, 0
      %p107 = por %p105, %p106
      %p108 = scmp.le.s32.totalorder 1, %s8
      %p109 = scmp.lt.s32.totalorder %s8, 3
      %p110 = pnand %p108, %p109
      %p111 = pneg %p110
      // Predicated region
      $region9: #{a_call__.1} parent=5 // pred_check
        _
      $region10: #{a_call__.1} parent=5 // pred_check_branch
        %113 = sbr.rel (%p110) target = $region12
      $region11: #{a_call__.1} parent=5 // pred_region
        %s114 = ssub.s32 %s8, 1
      $region12: #{a_call__.1} parent=5 // pred_fallthru
        _
      %p115 = scmp.lt.s32.totalorder %s8, 2
      // Predicated region
      $region13: #{a_call__.1} parent=5 // pred_check
        %p116 = pneg %p115
      $region14: #{a_call__.1} parent=5 // pred_check_branch
        %118 = sbr.rel (%p116) target = $region16
      $region15: #{a_call__.1} parent=5 // pred_region
        // Predicated region
        $region17: #{a_call__.1} parent=15 // pred_check
          %p119 = pneg %p42
        $region18: #{a_call__.1} parent=15 // pred_check_branch
          %121 = sbr.rel (%p119) target = $region20
        $region19: #{a_call__.1} parent=15 // pred_region
          %s122 = smul.u32 2, %s15
          %s123 = smul.u32 2, %s16
          %s124 = ssub.s32 3, %s122
          %p125 = scmp.lt.s32.totalorder %s124, 2
          %s126 = scalar_select %p125, %s124, 2
          %s127 = smul.u32 8, %s126
          %s128 = smul.u32 %s127, 2
          %p129 = scmp.lt.s32.totalorder %s122, 2
          %s130 = scalar_select %p129, %s122, 2
          %p131 = scmp.lt.s32.totalorder %s123, 1
          %s132 = scalar_select %p131, %s123, 1
          %s133 = smul.addr %s130, 2
          %s134 = sadd.s32 %s132, %s133
          %s135 = smul.addr %s134, 8
          %s136 = scalar_lea.vmem %s0, %s135
          %s137 = smul.u32 2, %s15
          %s138 = smul.u32 2, %s16
          %s139 = ssub.s32 3, %s137
          %p140 = scmp.lt.s32.totalorder %s139, 2
          %s141 = scalar_select %p140, %s139, 2
          %s142 = smul.u32 8, %s141
          %s143 = smul.u32 %s142, 2
        $region20: #{a_call__.1} parent=15 // pred_fallthru
          _
        // Predicated region
        $region21: #{a_call__.1} parent=15 // pred_check
          %p144 = pneg %p68
        $region22: #{a_call__.1} parent=15 // pred_check_branch
          %146 = sbr.rel (%p144) target = $region24
        $region23: #{a_call__.1} parent=15 // pred_region
          %s147 = smul.u32 2, %s15
          %s148 = ssub.s32 3, %s147
          %p149 = scmp.lt.s32.totalorder %s148, 2
          %s150 = scalar_select %p149, %s148, 2
          %s151 = smul.u32 8, %s150
          %p152 = scmp.lt.s32.totalorder %s147, 2
          %s153 = scalar_select %p152, %s147, 2
          %s154 = smul.addr %s153, 8
          %s155 = scalar_lea.vmem %s1, %s154
          %s156 = smul.u32 2, %s15
          %s157 = ssub.s32 3, %s156
          %p158 = scmp.lt.s32.totalorder %s157, 2
          %s159 = scalar_select %p158, %s157, 2
          %s160 = smul.u32 8, %s159
        $region24: #{a_call__.1} parent=15 // pred_fallthru
          _
      $region16: #{a_call__.1} parent=5 // pred_fallthru
        _
      %p161 = scmp.le.s32.totalorder 1, %s8
      %p162 = scmp.lt.s32.totalorder %s8, 3
      %p163 = pnand %p161, %p162
      %p164 = pneg %p163
      // Predicated region
      $region25: #{a_call__.1} parent=5 // pred_check
        _
      $region26: #{a_call__.1} parent=5 // pred_check_branch
        %166 = sbr.rel (%p163) target = $region28
      $region27: #{a_call__.1} parent=5 // pred_region
        %s167 = ssub.s32 %s8, 1
        %s168 = smul.u32 2, %s17
        %s169 = smul.u32 2, %s18
        %s170 = ssub.s32 3, %s168
        %p171 = scmp.lt.s32.totalorder %s170, 2
        %s172 = scalar_select %p171, %s170, 2
        %s173 = smul.u32 8, %s172
        %s174 = smul.u32 %s173, 2
        %p175 = scmp.lt.s32.totalorder %s168, 2
        %s176 = scalar_select %p175, %s168, 2
        %p177 = scmp.lt.s32.totalorder %s169, 1
        %s178 = scalar_select %p177, %s169, 1
        %s179 = smul.addr %s176, 2
        %s180 = sadd.s32 %s178, %s179
        %s181 = smul.addr %s180, 8
        %s182 = scalar_lea.vmem %s0, %s181
        %p183 = pneg %p48
        %p184 = pneg %p45
        %s185 = smul.u32 2, %s17
        %s186 = ssub.s32 3, %s185
        %p187 = scmp.lt.s32.totalorder %s186, 2
        %s188 = scalar_select %p187, %s186, 2
        %s189 = smul.u32 8, %s188
        %p190 = scmp.lt.s32.totalorder %s185, 2
        %s191 = scalar_select %p190, %s185, 2
        %s192 = smul.addr %s191, 8
        %s193 = scalar_lea.vmem %s1, %s192
        %p194 = pneg %p74
        %p195 = pneg %p71
        %p196 = pneg %p100
        %p197 = pneg %p97
        %s198 = sand.u32 %s87, 1
        %s199 = sand.u32 %s87, 1
        %s200 = smul.addr %s199, 16
        %s201 = scalar_lea.vmem [#allocation5], %s200
        %s202 = smul.u32 2, %s17
        %s203 = smul.u32 2, %s18
        %s204 = ssub.s32 3, %s202
        %p205 = scmp.lt.s32.totalorder %s204, 2
        %s206 = scalar_select %p205, %s204, 2
        %s207 = smul.u32 8, %s206
        %s208 = smul.u32 %s207, 2
        %p209 = scmp.lt.s32.totalorder %s202, 2
        %s210 = scalar_select %p209, %s202, 2
        %p211 = scmp.lt.s32.totalorder %s203, 1
        %s212 = scalar_select %p211, %s203, 1
        %s213 = smul.addr %s210, 2
        %s214 = sadd.s32 %s212, %s213
        %s215 = smul.addr %s214, 8
        %s216 = scalar_lea.vmem %s0, %s215
        %s217 = smul.u32 2, %s17
        %s218 = smul.u32 2, %s18
        %s219 = ssub.s32 3, %s217
        %p220 = scmp.lt.s32.totalorder %s219, 2
        %s221 = scalar_select %p220, %s219, 2
        %s222 = smul.u32 8, %s221
        %s223 = smul.u32 %s222, 2
        %s224 = smul.u32 2, %s17
        %s225 = ssub.s32 3, %s224
        %p226 = scmp.lt.s32.totalorder %s225, 2
        %s227 = scalar_select %p226, %s225, 2
        %s228 = smul.u32 8, %s227
        %p229 = scmp.lt.s32.totalorder %s224, 2
        %s230 = scalar_select %p229, %s224, 2
        %s231 = smul.addr %s230, 8
        %s232 = scalar_lea.vmem %s1, %s231
        %s233 = smul.u32 2, %s17
        %s234 = ssub.s32 3, %s233
        %p235 = scmp.lt.s32.totalorder %s234, 2
        %s236 = scalar_select %p235, %s234, 2
        %s237 = smul.u32 8, %s236
        %s238 = smul.u32 2, %s17
        %s239 = ssub.s32 3, %s238
        %p240 = scmp.lt.s32.totalorder %s239, 2
        %s241 = scalar_select %p240, %s239, 2
        %s242 = smul.u32 8, %s241
        %p243 = scmp.eq.s32.totalorder %s18, 0
        // Predicated region
        $region29: #{a_call__.1} parent=27 // pred_check
          %p244 = pneg %p243
        $region30: #{a_call__.1} parent=27 // pred_check_branch
          %246 = sbr.rel (%p244) target = $region32
        $region31: #{a_call__.1} parent=27 // pred_region
          %vm247 = vcmask 7168
          %248 = vst.msk [vmem:[#allocation2] sm:$0xff] %vm247, -1e+30
          %249 = vst.msk [vmem:[#allocation2 + $0x8] sm:$0xff] %vm247, -1e+30
          %250 = vst.msk [vmem:[#allocation3] sm:$0xff] %vm247, 0.0
          %251 = vst.msk [vmem:[#allocation3 + $0x8] sm:$0xff] %vm247, 0.0
          %252 = vst.msk [vmem:[#allocation4] sm:$0xff] %vm247, 0.0
          %253 = vst.msk [vmem:[#allocation4 + $0x8] sm:$0xff] %vm247, 0.0
        $region32: #{a_call__.1} parent=27 // pred_fallthru
          _
        %v254 = vld [vmem:[%s216] sm:$0xff]
        %v255 = vld [vmem:[%s216 + $0x8] sm:$0xff]
        %v256 = vld [vmem:[%s216 + $0x10] sm:$0xff]
        %v257 = vld [vmem:[%s216 + $0x18] sm:$0xff]
        %v258 = vld [vmem:[%s232] sm:$0xff]
        %v259 = vld [vmem:[%s232 + $0x8] sm:$0xff]
        %s260 = smul.u32 %s18, 160
        %v261 = vlaneseq
        %v262 = vand.u32 %v261, 127
        %v263 = vadd.s32 %v262, 128
        %v264 = vstv %s260
        %v265 = vadd.s32 %v264, %v262
        %v266 = vadd.s32 %v264, %v263
        %s267 = smul.u32 %s17, 16
        %v268 = vlaneseq
        %v269 = vshrl.u32 %v268, 7
        %v270 = vadd.s32 %v269, 8
        %v271 = vstv %s267
        %v272 = vadd.s32 %v271, %v269
        %v273 = vadd.s32 %v271, %v270
        %vm274 = vcmp.lt.s32.totalorder %v272, 18
        %vm275 = vcmp.lt.s32.totalorder %v273, 18
        %v276 = vsel %vm274, 1, 0
        %v277 = vsel %vm275, 1, 0
        %vm278 = vcmp.eq.s32.totalorder %v276, 1
        %vm279 = vcmp.eq.s32.totalorder %v277, 1
        %v280 = vsel %vm278, %v254, -1e+30
        %v281 = vsel %vm278, %v255, -1e+30
        %v282 = vsel %vm279, %v256, -1e+30
        %v283 = vsel %vm279, %v257, -1e+30
        %v284 = vld [vmem:[#allocation2] sm:$0xff]
        %v285 = vld [vmem:[#allocation2 + $0x8] sm:$0xff]
        %vm286 = vcmask 261120
        %v287 = vsel %vm286, %v281, -inf
        %v288 = vmax.f32 %v280, %v287
        %289 = vmax.xlane.f32.xlu0 %v288
        %v290 = vpop.xlane.xlu0 %289
        %v291 = vsel %vm286, %v283, -inf
        %v292 = vmax.f32 %v282, %v291
        %293 = vmax.xlane.f32.xlu0 %v292
        %v294 = vpop.xlane.xlu0 %293
        %v295 = vmax.f32 %v284, %v290
        %v296 = vmax.f32 %v285, %v294
        %v297 = vsub.f32 %v284, %v295
        %v298 = vsub.f32 %v285, %v296
        %v299 = vmul.f32 %v297, 1.442695
        %v300 = vpow.pop %v299
        %v301 = vmul.f32 %v298, 1.442695
        %v302 = vpow.pop %v301
        %v303 = vld [vmem:[#allocation3] sm:$0xff]
        %v304 = vld [vmem:[#allocation3 + $0x8] sm:$0xff]
        %v305 = vmul.f32 %v300, %v303
        %v306 = vmul.f32 %v302, %v304
        %308 = vset.pattern.permute.xlu0 0
        %309 = vperm.xlu0 %308, %v295
        %v310 = vpop.permute.xlu0 %309
        %313 = vset.pattern.permute.xlu0 0
        %314 = vperm.xlu0 %313, %v296
        %v315 = vpop.permute.xlu0 %314
        %v317 = vsub.f32 %v280, %v310
        %v318 = vsub.f32 %v281, %v310
        %v319 = vsub.f32 %v282, %v315
        %v320 = vsub.f32 %v283, %v315
        %v321 = vmul.f32 %v317, 1.442695
        %v322 = vpow.pop %v321
        %v323 = vmul.f32 %v318, 1.442695
        %v324 = vpow.pop %v323
        %v325 = vmul.f32 %v319, 1.442695
        %v326 = vpow.pop %v325
        %v327 = vmul.f32 %v320, 1.442695
        %v328 = vpow.pop %v327
        %v329 = vsel %vm286, %v324, 0.0
        %v330 = vadd.f32 %v322, %v329
        %331 = vadd.xlane.f32.xlu0 %v330
        %v332 = vpop.xlane.xlu0 %331
        %v333 = vsel %vm286, %v328, 0.0
        %v334 = vadd.f32 %v326, %v333
        %335 = vadd.xlane.f32.xlu0 %v334
        %v336 = vpop.xlane.xlu0 %335
        %v337 = vadd.f32 %v305, %v332
        %v338 = vadd.f32 %v306, %v336
        %vm339 = vcmask 7168
        %340 = vst.msk [vmem:[#allocation3] sm:$0xff] %vm339, %v337
        %341 = vst.msk [vmem:[#allocation3 + $0x8] sm:$0xff] %vm339, %v338
        %342 = vst.msk [vmem:[#allocation2] sm:$0xff] %vm339, %v295
        %343 = vst.msk [vmem:[#allocation2 + $0x8] sm:$0xff] %vm339, %v296
        %v344 = vld [vmem:[#allocation4] sm:$0xff]
        %v345 = vld [vmem:[#allocation4 + $0x8] sm:$0xff]
        %346 = vset.pattern.permute.xlu0 0
        %347 = vperm.xlu0 %346, %v258
        %v348 = vpop.permute.xlu0 %347
        %349 = vset.pattern.permute.xlu0 0
        %350 = vperm.xlu0 %349, %v259
        %v351 = vpop.permute.xlu0 %350
        %vm352 = vcmp.eq.s32.totalorder %v265, %v348
        %vm353 = vcmp.eq.s32.totalorder %v266, %v348
        %vm354 = vcmp.eq.s32.totalorder %v265, %v351
        %vm355 = vcmp.eq.s32.totalorder %v266, %v351
        %v356 = vsel %vm352, %v280, 0.0
        %v357 = vsel %vm353, %v281, 0.0
        %v358 = vsel %vm354, %v282, 0.0
        %v359 = vsel %vm355, %v283, 0.0
        %v360 = vsel %vm286, %v357, 0.0
        %v361 = vadd.f32 %v356, %v360
        %362 = vadd.xlane.f32.xlu0 %v361
        %v363 = vpop.xlane.xlu0 %362
        %v364 = vsel %vm286, %v359, 0.0
        %v365 = vadd.f32 %v358, %v364
        %366 = vadd.xlane.f32.xlu0 %v365
        %v367 = vpop.xlane.xlu0 %366
        %v368 = vadd.f32 %v344, %v363
        %v369 = vadd.f32 %v345, %v367
        %370 = vst.msk [vmem:[#allocation4] sm:$0xff] %vm339, %v368
        %371 = vst.msk [vmem:[#allocation4 + $0x8] sm:$0xff] %vm339, %v369
        // Predicated region
        $region33: #{a_call__.1} parent=27 // pred_check
          %p372 = pneg %p243
        $region34: #{a_call__.1} parent=27 // pred_check_branch
          %374 = sbr.rel (%p372) target = $region36
        $region35: #{a_call__.1} parent=27 // pred_region
          %v375 = vld [vmem:[#allocation2] sm:$0xff]
          %v376 = vld [vmem:[#allocation2 + $0x8] sm:$0xff]
          %v377 = vld [vmem:[#allocation3] sm:$0xff]
          %v378 = vld [vmem:[#allocation3 + $0x8] sm:$0xff]
          %v379 = vlog2.pop %v377
          %v380 = vmul.f32 %v379, 0.6931472
          %v381 = vlog2.pop %v378
          %v382 = vmul.f32 %v381, 0.6931472
          %v383 = vadd.f32 %v375, %v380
          %v384 = vadd.f32 %v376, %v382
          %vm385 = vcmp.ge.s32.totalorder %v258, 0
          %vm386 = vcmp.ge.s32.totalorder %v259, 0
          %vm387 = vmand %vm385, %vm274
          %vm388 = vmand %vm386, %vm275
          %v389 = vsel %vm387, 1.0, 0.0
          %v390 = vsel %vm388, 1.0, 0.0
          %v391 = vld [vmem:[#allocation4] sm:$0xff]
          %v392 = vld [vmem:[#allocation4 + $0x8] sm:$0xff]
          %v393 = vsub.f32 %v383, %v391
          %v394 = vsub.f32 %v384, %v392
          %v395 = vmul.f32 %v393, %v389
          %v396 = vmul.f32 %v394, %v390
          %397 = vst.msk [vmem:[%s201] sm:$0xff] %vm339, %v395
          %398 = vst.msk [vmem:[%s201 + $0x8] sm:$0xff] %vm339, %v396
        $region36: #{a_call__.1} parent=27 // pred_fallthru
          _
        %s399 = sand.u32 %s87, 1
        %s400 = sand.u32 %s87, 1
        %s401 = smul.addr %s400, 16
        %s402 = scalar_lea.vmem [#allocation5], %s401
        // Predicated region
        $region37: #{a_call__.1} parent=27 // pred_check
          %p403 = pneg %p97
        $region38: #{a_call__.1} parent=27 // pred_check_branch
          %405 = sbr.rel (%p403) target = $region40
        $region39: #{a_call__.1} parent=27 // pred_region
          %s406 = smul.u32 2, %s17
          %s407 = ssub.s32 3, %s406
          %p408 = scmp.lt.s32.totalorder %s407, 2
          %s409 = scalar_select %p408, %s407, 2
          %s410 = smul.u32 8, %s409
          %p411 = scmp.ne.s32.totalorder 0, %s410
          %s412 = smul.addr %s406, 8
          %s413 = scalar_lea.vmem %s2, %s412
          // Predicated region
          $region41: #{a_call__.1} parent=39 // pred_check
            %p414 = pneg %p411
          $region42: #{a_call__.1} parent=39 // pred_check_branch
            %416 = sbr.rel (%p414) target = $region44
          $region43: #{a_call__.1} parent=39 // pred_region
            // Predicated region
            $region45: #{a_call__.1} parent=43 // pred_check
              _
            $region46: #{a_call__.1} parent=43 // pred_check_branch
              %418 = sbr.rel (0) target = $region48
            $region47: #{a_call__.1} parent=43 // pred_region
              // Predicated region
              $region67: #{a_call__.1} parent=47 // pred_check
                _
              $region68: #{a_call__.1} parent=47 // pred_check_branch
                %470 = sbr.rel (0) target = $region70
              $region69: #{a_call__.1} parent=47 // pred_region
                %s471 = sshrl.u32 %s409, 1
                // While loop
                $region71: #{a_call__.1} parent=69 // loop_pre_header
                  _
                $region72: #{a_call__.1} parent=69 // loop_header
                  %s473 = sphi 0, %s475
                  %p474 = scmp.ge.s32.totalorder %s473, %s471
                  %s478 = sphi 0, %s487
                  %s479 = sphi %s402, %s490
                  %s480 = sphi %s413, %s491
                $region73: #{a_call__.1} parent=69 // loop_header_branch
                  %477 = sbr.rel (%p474) target = $region77
                $region74: #{a_call__.1} parent=69 // loop_body
                  %v481 = vld [vmem:[%s479] sm:$0xff]
                  %482 = vst [vmem:[%s480] sm:$0xff] %v481
                  %v483 = vld [vmem:[%s479 + $0x8] sm:$0xff]
                  %484 = vst [vmem:[%s480 + $0x8] sm:$0xff] %v483
                  %s485 = sadd.s32 1, %s478
                  %p486 = scmp.ge.s32.totalorder %s485, %s471
                  %s487 = scalar_select %p486, 0, %s485
                  %s488 = smul.u32 %s487, 16
                  %s489 = smul.u32 %s487, 16
                  %s490 = scalar_lea.vmem %s402, %s488 [#allocation5]
                  %s491 = scalar_lea.vmem %s413, %s489
                $region75: #{a_call__.1} parent=69 // loop_footer
                  %s475 = sadd.s32 %s473, 1
                $region76: #{a_call__.1} parent=69 // loop_footer_branch
                  %472 = sbr.rel target = $region72
                $region77: #{a_call__.1} parent=69 // loop_exit
                  _
                %s492 = sshrl.u32 %s409, 1
                %s493 = sand.u32 %s409, 1
                %s494 = smul.u32 %s492, 2
                %s495 = smul.u32 8, %s494
                %s496 = scalar_lea.vmem %s402, %s495 [#allocation5]
                %s497 = smul.u32 8, %s494
                %s498 = scalar_lea.vmem %s413, %s497
                // While loop
                $region78: #{a_call__.1} parent=69 // loop_pre_header
                  _
                $region79: #{a_call__.1} parent=69 // loop_header
                  %s500 = sphi 0, %s502
                  %p501 = scmp.ge.s32.totalorder %s500, %s493
                  %s505 = sphi 0, %s512
                  %s506 = sphi %s496, %s515
                  %s507 = sphi %s498, %s516
                $region80: #{a_call__.1} parent=69 // loop_header_branch
                  %504 = sbr.rel (%p501) target = $region84
                $region81: #{a_call__.1} parent=69 // loop_body
                  %v508 = vld [vmem:[%s506] sm:$0xff]
                  %509 = vst [vmem:[%s507] sm:$0xff] %v508
                  %s510 = sadd.s32 1, %s505
                  %p511 = scmp.ge.s32.totalorder %s510, %s493
                  %s512 = scalar_select %p511, 0, %s510
                  %s513 = smul.u32 %s512, 8
                  %s514 = smul.u32 %s512, 8
                  %s515 = scalar_lea.vmem %s496, %s513 [#allocation5]
                  %s516 = scalar_lea.vmem %s498, %s514
                $region82: #{a_call__.1} parent=69 // loop_footer
                  %s502 = sadd.s32 %s500, 1
                $region83: #{a_call__.1} parent=69 // loop_footer_branch
                  %499 = sbr.rel target = $region79
                $region84: #{a_call__.1} parent=69 // loop_exit
                  _
              $region70: #{a_call__.1} parent=47 // pred_fallthru
                _
              // Predicated region
              $region85: #{a_call__.1} parent=47 // pred_check
                _
              $region86: #{a_call__.1} parent=47 // pred_check_branch
                %518 = sbr.rel target = $region88
              $region87: #{a_call__.1} parent=47 // pred_region
                _
              $region88: #{a_call__.1} parent=47 // pred_fallthru
                _
            $region48: #{a_call__.1} parent=43 // pred_fallthru
              _
            // Predicated region
            $region49: #{a_call__.1} parent=43 // pred_check
              _
            $region50: #{a_call__.1} parent=43 // pred_check_branch
              %420 = sbr.rel target = $region52
            $region51: #{a_call__.1} parent=43 // pred_region
              %s422 = ssub.s32 256, 1
              %s423 = sshrl.u32 %s409, 1
              // While loop
              $region53: #{a_call__.1} parent=51 // loop_pre_header
                _
              $region54: #{a_call__.1} parent=51 // loop_header
                %s425 = sphi 0, %s427
                %p426 = scmp.ge.s32.totalorder %s425, %s423
                %s430 = sphi 0, %s439
                %s431 = sphi %s402, %s442
                %s432 = sphi %s413, %s443
              $region55: #{a_call__.1} parent=51 // loop_header_branch
                %429 = sbr.rel (%p426) target = $region59
              $region56: #{a_call__.1} parent=51 // loop_body
                %v433 = vld [vmem:[%s431] sm:%s422]
                %434 = vst [vmem:[%s432] sm:%s422] %v433
                %v435 = vld [vmem:[%s431 + $0x8] sm:%s422]
                %436 = vst [vmem:[%s432 + $0x8] sm:%s422] %v435
                %s437 = sadd.s32 1, %s430
                %p438 = scmp.ge.s32.totalorder %s437, %s423
                %s439 = scalar_select %p438, 0, %s437
                %s440 = smul.u32 %s439, 16
                %s441 = smul.u32 %s439, 16
                %s442 = scalar_lea.vmem %s402, %s440 [#allocation5]
                %s443 = scalar_lea.vmem %s413, %s441
              $region57: #{a_call__.1} parent=51 // loop_footer
                %s427 = sadd.s32 %s425, 1
              $region58: #{a_call__.1} parent=51 // loop_footer_branch
                %424 = sbr.rel target = $region54
              $region59: #{a_call__.1} parent=51 // loop_exit
                _
              %s444 = sshrl.u32 %s409, 1
              %s445 = sand.u32 %s409, 1
              %s446 = smul.u32 %s444, 2
              %s447 = smul.u32 8, %s446
              %s448 = scalar_lea.vmem %s402, %s447 [#allocation5]
              %s449 = smul.u32 8, %s446
              %s450 = scalar_lea.vmem %s413, %s449
              // While loop
              $region60: #{a_call__.1} parent=51 // loop_pre_header
                _
              $region61: #{a_call__.1} parent=51 // loop_header
                %s452 = sphi 0, %s454
                %p453 = scmp.ge.s32.totalorder %s452, %s445
                %s457 = sphi 0, %s464
                %s458 = sphi %s448, %s467
                %s459 = sphi %s450, %s468
              $region62: #{a_call__.1} parent=51 // loop_header_branch
                %456 = sbr.rel (%p453) target = $region66
              $region63: #{a_call__.1} parent=51 // loop_body
                %v460 = vld [vmem:[%s458] sm:%s422]
                %461 = vst [vmem:[%s459] sm:%s422] %v460
                %s462 = sadd.s32 1, %s457
                %p463 = scmp.ge.s32.totalorder %s462, %s445
                %s464 = scalar_select %p463, 0, %s462
                %s465 = smul.u32 %s464, 8
                %s466 = smul.u32 %s464, 8
                %s467 = scalar_lea.vmem %s448, %s465 [#allocation5]
                %s468 = scalar_lea.vmem %s450, %s466
              $region64: #{a_call__.1} parent=51 // loop_footer
                %s454 = sadd.s32 %s452, 1
              $region65: #{a_call__.1} parent=51 // loop_footer_branch
                %451 = sbr.rel target = $region61
              $region66: #{a_call__.1} parent=51 // loop_exit
                _
            $region52: #{a_call__.1} parent=43 // pred_fallthru
              _
          $region44: #{a_call__.1} parent=39 // pred_fallthru
            _
          %519 = vnop
        $region40: #{a_call__.1} parent=27 // pred_fallthru
          _
      $region28: #{a_call__.1} parent=5 // pred_fallthru
        _
      %p520 = scmp.le.s32.totalorder 2, %s8
      // Predicated region
      $region89: #{a_call__.1} parent=5 // pred_check
        %p521 = pneg %p520
      $region90: #{a_call__.1} parent=5 // pred_check_branch
        %523 = sbr.rel (%p521) target = $region92
      $region91: #{a_call__.1} parent=5 // pred_region
        %s524 = ssub.s32 %s8, 2
        // Predicated region
        $region93: #{a_call__.1} parent=91 // pred_check
          %p525 = pneg %p103
        $region94: #{a_call__.1} parent=91 // pred_check_branch
          %527 = sbr.rel (%p525) target = $region96
        $region95: #{a_call__.1} parent=91 // pred_region
          %s528 = sand.u32 %s88, 1
          %s529 = sand.u32 %s88, 1
          %s530 = smul.addr %s529, 16
          %s531 = scalar_lea.vmem [#allocation5], %s530
        $region96: #{a_call__.1} parent=91 // pred_fallthru
          _
      $region92: #{a_call__.1} parent=5 // pred_fallthru
        _
    $region6: #{a_call__.1} parent=1 // loop_footer
      %s12 = sadd.s32 1, %s8
    $region7: #{a_call__.1} parent=1 // loop_footer_branch
      %7 = sbr.rel target = $region3
    $region8: #{a_call__.1} parent=1 // loop_exit
      _

</llo_original>
